<compile_context>
chip_gen: v6e
topology: v6e:2x2x1
jax: 0.10.0
libtpu: 0.0.40
codegen_flags: <defaults>
</compile_context>

<pallas_src>
import functools

import jax
import jax.numpy as jnp
from jax import lax
from jax.experimental import pallas as pl
from jax.experimental.pallas import tpu as pltpu


# Configuration mirroring:
#   ConvUnit(in_ch=4, out_ch=8, kernel=3, is_bn=True, is_leaky=True, alpha=0.1)
IN_CH, OUT_CH, KERNEL = 4, 8, 3
ALPHA = 0.1
BN_EPS = 1e-5
LANES = 128

# Set to jnp.bfloat16 for ~3x MXU throughput on v6e/v7x if a >1e-3 output
# tolerance is acceptable (BN normalization amplifies bf16 rounding here).
MXU_DTYPE = jnp.float32


def _round_up(x, m):
    return (x + m - 1) // m * m


def conv_unit_kernel(x_ref, w_ref, bias_ref, gamma_ref, beta_ref, fold_ref,
                     o_ref, *, kh, out_rows, h_pad, ho, wo, cout, alpha, eps,
                     inv_count):
    """Fused VALID conv (block-Toeplitz) + LeakyReLU + BatchNorm2d.

    x_ref:     (N*H + row_pad, W*Cin)       lane-dense input slab      VMEM
    w_ref:     (KH, W*Cin, WO_PAD*Cout)     block-Toeplitz weights     VMEM
    bias_ref:  (1, WO_PAD*Cout)             conv bias, lane-tiled      VMEM
    gamma_ref: (1, WO_PAD*Cout)             BN gamma, lane-tiled       VMEM
    beta_ref:  (1, WO_PAD*Cout)             BN beta, lane-tiled        VMEM
    fold_ref:  (WO_PAD*Cout, WO_PAD*Cout)   channel fold+broadcast     VMEM
    o_ref:     (N*H, WO_PAD*Cout)           lane-dense output slab     VMEM
    """
    # ---- Conv2d (VALID, stride 1): KH matmuls over row-shifted views of the
    #      lane-dense input; the 128-lane output slab comes straight off the MXU.
    acc = None
    for dy in range(kh):
        part = jnp.dot(x_ref[dy:dy + out_rows, :].astype(MXU_DTYPE),
                       w_ref[dy].astype(MXU_DTYPE),
                       preferred_element_type=jnp.float32)
        acc = part if acc is None else acc + part
    acc = acc + bias_ref[...]                      # (1, 128) broadcasts over rows

    # ---- LeakyReLU(alpha); stays in vregs (no VMEM scratch round-trip).
    act = jnp.where(acc > 0, acc, alpha * acc)

    # ---- BatchNorm2d (training mode), one-pass biased stats (sum & sum-sq).
    #      Pad rows (oh >= Ho within each batch) and pad lane groups (ow >= Wo)
    #      are masked out so they never enter the statistics.
    rid = lax.broadcasted_iota(jnp.int32, act.shape, 0)
    cid = lax.broadcasted_iota(jnp.int32, act.shape, 1)
    valid = ((rid % h_pad) < ho) & (cid < wo * cout)
    masked = jnp.where(valid, act, 0.0)

    row_sum = jnp.sum(masked, axis=0, keepdims=True)           # (1, 128)
    row_sq = jnp.sum(masked * masked, axis=0, keepdims=True)   # (1, 128)
    # Fold per-ow lanes into per-channel totals AND broadcast them back to all
    # ow lane slots in one tiny matmul each (no lane reshape / tile needed).
    mean = jnp.dot(row_sum, fold_ref[...],
                   preferred_element_type=jnp.float32) * inv_count
    ex2 = jnp.dot(row_sq, fold_ref[...],
                  preferred_element_type=jnp.float32) * inv_count
    var = ex2 - mean * mean                                    # biased variance
    scale = gamma_ref[...] * lax.rsqrt(var + eps)              # (1, 128)
    shift = beta_ref[...] - mean * scale                       # (1, 128)

    # ---- single full-width store: rows multiple of 8, 128 lanes -> plain vst.
    o_ref[...] = (act * scale + shift).astype(o_ref.dtype)


@jax.jit
def conv_unit_forward(x_nchw, w_oihw, bias, gamma, beta):
    """PyTorch-equivalent forward: x (N,Cin,H,W) -> (N,Cout,Ho,Wo)."""
    N, Cin, H, W = x_nchw.shape
    Cout, _, KH, KW = w_oihw.shape
    Ho, Wo = H - KH + 1, W - KW + 1
    assert LANES % Cout == 0
    wo_pad = _round_up(Wo * Cout, LANES) // Cout   # wo_pad*Cout % 128 == 0
    out_rows = N * H                               # per-batch rows padded Ho -> H
    x_rows = _round_up(N * H + KH - 1, 8)          # room for the dy row shifts

    # --- lane-dense input slab (N*H, W*Cin); zero rows appended for the shifts.
    x_nhwc = jnp.transpose(x_nchw, (0, 2, 3, 1)).astype(jnp.float32)
    x2d = x_nhwc.reshape(N * H, W * Cin)
    x2d = jnp.pad(x2d, ((0, x_rows - N * H), (0, 0)))

    # --- block-Toeplitz weights: per dy, (W*Cin, wo_pad*Cout), Wo-pad cols = 0.
    #     W_dy[(ow+dx)*Cin + c, ow*Cout + co] = w_oihw[co, c, dy, dx]
    w_hwio = jnp.transpose(w_oihw, (2, 3, 1, 0)).astype(jnp.float32)  # (KH,KW,Cin,Cout)
    mats = []
    for dy in range(KH):
        col_blocks = []
        for ow in range(wo_pad):
            blk = jnp.zeros((W, Cin, Cout), jnp.float32)
            if ow < Wo:
                blk = lax.dynamic_update_slice(blk, w_hwio[dy], (ow, 0, 0))
            col_blocks.append(blk.reshape(W * Cin, Cout))
        mats.append(jnp.concatenate(col_blocks, axis=1))
    w_toe = jnp.stack(mats, axis=0)                # (KH, W*Cin, wo_pad*Cout)

    # --- per-channel params tiled to the 128-lane layout (lane = ow*Cout + co).
    bias128 = jnp.tile(bias.reshape(1, Cout).astype(jnp.float32), (1, wo_pad))
    gamma128 = jnp.tile(gamma.reshape(1, Cout).astype(jnp.float32), (1, wo_pad))
    beta128 = jnp.tile(beta.reshape(1, Cout).astype(jnp.float32), (1, wo_pad))

    # --- channel fold+broadcast matrix: M[l, m] = (l % Cout == m % Cout).
    lane = jnp.arange(wo_pad * Cout)
    fold = (lane[:, None] % Cout == lane[None, :] % Cout).astype(jnp.float32)

    kernel = functools.partial(
        conv_unit_kernel, kh=KH, out_rows=out_rows, h_pad=H, ho=Ho, wo=Wo,
        cout=Cout, alpha=ALPHA, eps=BN_EPS, inv_count=1.0 / (N * Ho * Wo))

    # TODO(synk): for large N/H/W (esp. v7x: 64 MiB VMEM, 2 TensorCores), add a
    # grid over N / Ho row-blocks with a KH-1 halo and "parallel" dimension
    # semantics, split BN into a per-tile sum/sumsq accumulation phase plus a
    # normalize phase, and set vmem_limit_bytes for the 64 MiB budget; at these
    # toy shapes (32x128 output) single-block residency is the right choice.
    out2d = pl.pallas_call(
        kernel,
        out_shape=jax.ShapeDtypeStruct((out_rows, wo_pad * Cout), jnp.float32),
        in_specs=[pl.BlockSpec(memory_space=pltpu.MemorySpace.VMEM)] * 6,
        out_specs=pl.BlockSpec(memory_space=pltpu.MemorySpace.VMEM),
    )(x2d, w_toe, bias128, gamma128, beta128, fold)

    out_nhwc = out2d.reshape(N, H, wo_pad, Cout)[:, :Ho, :Wo, :]
    return jnp.transpose(out_nhwc, (0, 3, 1, 2))   # back to NCHW


def reference_forward(x_nchw, w_oihw, bias, gamma, beta):
    """Pure-JAX reference matching the PyTorch module semantics."""
    y = lax.conv_general_dilated(
        x_nchw.astype(jnp.float32), w_oihw.astype(jnp.float32),
        window_strides=(1, 1), padding="VALID",
        dimension_numbers=("NCHW", "OIHW", "NCHW"),
    )
    y = y + bias.reshape(1, -1, 1, 1)
    y = jnp.where(y > 0, y, ALPHA * y)                       # LeakyReLU
    mean = jnp.mean(y, axis=(0, 2, 3), keepdims=True)        # BN training-mode stats
    var = jnp.mean((y - mean) ** 2, axis=(0, 2, 3), keepdims=True)
    y = (y - mean) * lax.rsqrt(var + BN_EPS)
    return y * gamma.reshape(1, -1, 1, 1) + beta.reshape(1, -1, 1, 1)


if __name__ == "__main__":
    key = jax.random.PRNGKey(0)
    kx, kw, kb, kg, kbe = jax.random.split(key, 5)

    N, H, W = 2, 16, 16
    x = jax.random.normal(kx, (N, IN_CH, H, W), dtype=jnp.float32)

    # Deterministic synthetic parameters (shapes from Conv2d / BatchNorm2d __init__).
    fan_in = IN_CH * KERNEL * KERNEL
    bound = 1.0 / (fan_in ** 0.5)
    w = jax.random.uniform(kw, (OUT_CH, IN_CH, KERNEL, KERNEL),
                           minval=-bound, maxval=bound, dtype=jnp.float32)
    b = jax.random.uniform(kb, (OUT_CH,), minval=-bound, maxval=bound,
                           dtype=jnp.float32)
    gamma = 1.0 + 0.1 * jax.random.normal(kg, (OUT_CH,), dtype=jnp.float32)
    beta = 0.1 * jax.random.normal(kbe, (OUT_CH,), dtype=jnp.float32)

    out = conv_unit_forward(x, w, b, gamma, beta)
    out = jax.block_until_ready(out)

    ref = jax.block_until_ready(reference_forward(x, w, b, gamma, beta))

    assert out.shape == (N, OUT_CH, H - KERNEL + 1, W - KERNEL + 1), out.shape
    assert jnp.allclose(out, ref, rtol=1e-3, atol=1e-3), (
        float(jnp.max(jnp.abs(out - ref)))
    )

    print("KERNEL_OK")
</pallas_src>

<mosaic_0001>
module attributes {stable_mosaic.version = 11 : i64} {
  func.func @conv_unit_kernel(%arg0: memref<40x64xf32, #tpu.memory_space<vmem>>, %arg1: memref<3x64x128xf32, #tpu.memory_space<vmem>>, %arg2: memref<1x128xf32, #tpu.memory_space<vmem>>, %arg3: memref<1x128xf32, #tpu.memory_space<vmem>>, %arg4: memref<1x128xf32, #tpu.memory_space<vmem>>, %arg5: memref<128x128xf32, #tpu.memory_space<vmem>>, %arg6: memref<32x128xf32, #tpu.memory_space<vmem>>) attributes {dimension_semantics = [], scalar_prefetch = 0 : i64, scratch_operands = 0 : i64, tpu.core_type = #tpu.core_type<tc>} {
    %c0 = arith.constant 0 : index
    %c0_0 = arith.constant 0 : index
    %0 = vector.load %arg0[%c0, %c0_0] : memref<40x64xf32, #tpu.memory_space<vmem>>, vector<32x64xf32>
    %c0_1 = arith.constant 0 : index
    %c0_2 = arith.constant 0 : index
    %c0_3 = arith.constant 0 : index
    %1 = vector.load %arg1[%c0_1, %c0_2, %c0_3] : memref<3x64x128xf32, #tpu.memory_space<vmem>>, vector<1x64x128xf32>
    %2 = vector.shape_cast %1 : vector<1x64x128xf32> to vector<64x128xf32>
    %cst = arith.constant dense<0.000000e+00> : vector<32x128xf32>
    %3 = tpu.matmul %0, %2, %cst {dimension_numbers = #tpu.dot_dimension_numbers<[1], [0], [0], [1], [0, 0, 1, 1], [], []>} : vector<32x64xf32>, vector<64x128xf32>, vector<32x128xf32> -> vector<32x128xf32>
    %c1 = arith.constant 1 : index
    %c0_4 = arith.constant 0 : index
    %4 = vector.load %arg0[%c1, %c0_4] : memref<40x64xf32, #tpu.memory_space<vmem>>, vector<32x64xf32>
    %c1_5 = arith.constant 1 : index
    %c0_6 = arith.constant 0 : index
    %c0_7 = arith.constant 0 : index
    %5 = vector.load %arg1[%c1_5, %c0_6, %c0_7] : memref<3x64x128xf32, #tpu.memory_space<vmem>>, vector<1x64x128xf32>
    %6 = vector.shape_cast %5 : vector<1x64x128xf32> to vector<64x128xf32>
    %cst_8 = arith.constant dense<0.000000e+00> : vector<32x128xf32>
    %7 = tpu.matmul %4, %6, %cst_8 {dimension_numbers = #tpu.dot_dimension_numbers<[1], [0], [0], [1], [0, 0, 1, 1], [], []>} : vector<32x64xf32>, vector<64x128xf32>, vector<32x128xf32> -> vector<32x128xf32>
    %8 = arith.addf %3, %7 : vector<32x128xf32>
    %c2 = arith.constant 2 : index
    %c0_9 = arith.constant 0 : index
    %9 = vector.load %arg0[%c2, %c0_9] : memref<40x64xf32, #tpu.memory_space<vmem>>, vector<32x64xf32>
    %c2_10 = arith.constant 2 : index
    %c0_11 = arith.constant 0 : index
    %c0_12 = arith.constant 0 : index
    %10 = vector.load %arg1[%c2_10, %c0_11, %c0_12] : memref<3x64x128xf32, #tpu.memory_space<vmem>>, vector<1x64x128xf32>
    %11 = vector.shape_cast %10 : vector<1x64x128xf32> to vector<64x128xf32>
    %cst_13 = arith.constant dense<0.000000e+00> : vector<32x128xf32>
    %12 = tpu.matmul %9, %11, %cst_13 {dimension_numbers = #tpu.dot_dimension_numbers<[1], [0], [0], [1], [0, 0, 1, 1], [], []>} : vector<32x64xf32>, vector<64x128xf32>, vector<32x128xf32> -> vector<32x128xf32>
    %13 = arith.addf %8, %12 : vector<32x128xf32>
    %c0_14 = arith.constant 0 : index
    %c0_15 = arith.constant 0 : index
    %14 = vector.load %arg2[%c0_14, %c0_15] : memref<1x128xf32, #tpu.memory_space<vmem>>, vector<1x128xf32>
    %15 = vector.broadcast %14 : vector<1x128xf32> to vector<32x128xf32>
    %16 = arith.addf %13, %15 : vector<32x128xf32>
    %cst_16 = arith.constant 0.000000e+00 : f32
    %17 = vector.broadcast %cst_16 : f32 to vector<32x128xf32>
    %18 = arith.cmpf ogt, %16, %17 : vector<32x128xf32>
    %cst_17 = arith.constant 1.000000e-01 : f32
    %19 = vector.broadcast %cst_17 : f32 to vector<32x128xf32>
    %20 = arith.mulf %19, %16 : vector<32x128xf32>
    %21 = arith.select %18, %16, %20 : vector<32x128xi1>, vector<32x128xf32>
    %22 = tpu.iota {dimensions = array<i32: 0>} : vector<32x128xi32>
    %23 = tpu.iota {dimensions = array<i32: 1>} : vector<32x128xi32>
    %c16_i32 = arith.constant 16 : i32
    %c0_i32 = arith.constant 0 : i32
    %24 = arith.cmpi eq, %c16_i32, %c0_i32 : i32
    %c1_i32 = arith.constant 1 : i32
    %25 = arith.select %24, %c1_i32, %c16_i32 : i32
    %26 = vector.broadcast %25 : i32 to vector<32x128xi32>
    %27 = arith.remsi %22, %26 : vector<32x128xi32>
    %c0_i32_18 = arith.constant 0 : i32
    %28 = vector.broadcast %c0_i32_18 : i32 to vector<32x128xi32>
    %29 = arith.cmpi ne, %27, %28 : vector<32x128xi32>
    %c0_i32_19 = arith.constant 0 : i32
    %30 = vector.broadcast %c0_i32_19 : i32 to vector<32x128xi32>
    %31 = arith.cmpi slt, %27, %30 : vector<32x128xi32>
    %c0_i32_20 = arith.constant 0 : i32
    %32 = arith.cmpi slt, %25, %c0_i32_20 : i32
    %33 = vector.broadcast %32 : i1 to vector<32x128xi1>
    %34 = vector.broadcast %33 : vector<32x128xi1> to vector<32x128xi1>
    %35 = arith.xori %31, %34 : vector<32x128xi1>
    %36 = arith.andi %35, %29 : vector<32x128xi1>
    %37 = vector.broadcast %25 : i32 to vector<32x128xi32>
    %38 = arith.addi %27, %37 : vector<32x128xi32>
    %39 = arith.select %36, %38, %27 : vector<32x128xi1>, vector<32x128xi32>
    %c14_i32 = arith.constant 14 : i32
    %40 = vector.broadcast %c14_i32 : i32 to vector<32x128xi32>
    %41 = arith.cmpi slt, %39, %40 : vector<32x128xi32>
    %c112_i32 = arith.constant 112 : i32
    %42 = vector.broadcast %c112_i32 : i32 to vector<32x128xi32>
    %43 = arith.cmpi slt, %23, %42 : vector<32x128xi32>
    %44 = arith.andi %41, %43 : vector<32x128xi1>
    %cst_21 = arith.constant 0.000000e+00 : f32
    %45 = vector.broadcast %cst_21 : f32 to vector<32x128xf32>
    %46 = arith.select %44, %21, %45 : vector<32x128xi1>, vector<32x128xf32>
    %cst_22 = arith.constant dense<0.000000e+00> : vector<128xf32>
    %47 = vector.multi_reduction <add>, %46, %cst_22 [0] : vector<32x128xf32> to vector<128xf32>
    %48 = vector.shape_cast %47 : vector<128xf32> to vector<1x128xf32>
    %49 = arith.mulf %46, %46 : vector<32x128xf32>
    %cst_23 = arith.constant dense<0.000000e+00> : vector<128xf32>
    %50 = vector.multi_reduction <add>, %49, %cst_23 [0] : vector<32x128xf32> to vector<128xf32>
    %51 = vector.shape_cast %50 : vector<128xf32> to vector<1x128xf32>
    %c0_24 = arith.constant 0 : index
    %c0_25 = arith.constant 0 : index
    %52 = vector.load %arg5[%c0_24, %c0_25] : memref<128x128xf32, #tpu.memory_space<vmem>>, vector<128x128xf32>
    %cst_26 = arith.constant dense<0.000000e+00> : vector<1x128xf32>
    %53 = tpu.matmul %48, %52, %cst_26 {dimension_numbers = #tpu.dot_dimension_numbers<[1], [0], [0], [1], [0, 0, 1, 1], [], []>} : vector<1x128xf32>, vector<128x128xf32>, vector<1x128xf32> -> vector<1x128xf32>
    %cst_27 = arith.constant 0.00255102036 : f32
    %54 = vector.broadcast %cst_27 : f32 to vector<1x128xf32>
    %55 = arith.mulf %53, %54 : vector<1x128xf32>
    %c0_28 = arith.constant 0 : index
    %c0_29 = arith.constant 0 : index
    %56 = vector.load %arg5[%c0_28, %c0_29] : memref<128x128xf32, #tpu.memory_space<vmem>>, vector<128x128xf32>
    %cst_30 = arith.constant dense<0.000000e+00> : vector<1x128xf32>
    %57 = tpu.matmul %51, %56, %cst_30 {dimension_numbers = #tpu.dot_dimension_numbers<[1], [0], [0], [1], [0, 0, 1, 1], [], []>} : vector<1x128xf32>, vector<128x128xf32>, vector<1x128xf32> -> vector<1x128xf32>
    %cst_31 = arith.constant 0.00255102036 : f32
    %58 = vector.broadcast %cst_31 : f32 to vector<1x128xf32>
    %59 = arith.mulf %57, %58 : vector<1x128xf32>
    %60 = arith.mulf %55, %55 : vector<1x128xf32>
    %61 = arith.subf %59, %60 : vector<1x128xf32>
    %c0_32 = arith.constant 0 : index
    %c0_33 = arith.constant 0 : index
    %62 = vector.load %arg3[%c0_32, %c0_33] : memref<1x128xf32, #tpu.memory_space<vmem>>, vector<1x128xf32>
    %cst_34 = arith.constant 9.99999974E-6 : f32
    %63 = vector.broadcast %cst_34 : f32 to vector<1x128xf32>
    %64 = arith.addf %61, %63 : vector<1x128xf32>
    %65 = math.rsqrt %64 : vector<1x128xf32>
    %66 = arith.mulf %62, %65 : vector<1x128xf32>
    %c0_35 = arith.constant 0 : index
    %c0_36 = arith.constant 0 : index
    %67 = vector.load %arg4[%c0_35, %c0_36] : memref<1x128xf32, #tpu.memory_space<vmem>>, vector<1x128xf32>
    %68 = arith.mulf %55, %66 : vector<1x128xf32>
    %69 = arith.subf %67, %68 : vector<1x128xf32>
    %70 = vector.broadcast %66 : vector<1x128xf32> to vector<32x128xf32>
    %71 = arith.mulf %21, %70 : vector<32x128xf32>
    %72 = vector.broadcast %69 : vector<1x128xf32> to vector<32x128xf32>
    %73 = arith.addf %71, %72 : vector<32x128xf32>
    %c0_37 = arith.constant 0 : index
    %c0_38 = arith.constant 0 : index
    %74 = vector.load %arg6[%c0_37, %c0_38] : memref<32x128xf32, #tpu.memory_space<vmem>>, vector<32x128xf32>
    tpu.vector_store %arg6[%c0_37, %c0_38], %73 {strides = array<i32>} : memref<32x128xf32, #tpu.memory_space<vmem>>, vector<32x128xf32>,
    return
  }
}

</mosaic_0001>

<llo_original>
// kernel: conv_unit_forward.1
$region0: #{conv_unit_forward.1}
  #allocation0 [shape = 'u32[]', space=smem, size = 0x4, offset = 0x4, fixed_abs, tag = 'smem constant byte address 0x4 - core index']
  #allocation1 [shape = 'u32[144,128]{1,0:T(1,128)}', space=vmem, size = 0x12000, scoped, tag = 'internal scratch']
  %s0 = inlined_call_operand.vmem [shape: f32[40,64], index: 0, kind: input, shape index: {}]
  %s1 = inlined_call_operand.vmem [shape: f32[3,64,128], index: 1, kind: input, shape index: {}]
  %s2 = inlined_call_operand.vmem [shape: f32[1,128], index: 2, kind: input, shape index: {}]
  %s3 = inlined_call_operand.vmem [shape: f32[1,128], index: 3, kind: input, shape index: {}]
  %s4 = inlined_call_operand.vmem [shape: f32[1,128], index: 4, kind: input, shape index: {}]
  %s5 = inlined_call_operand.vmem [shape: f32[128,128], index: 5, kind: input, shape index: {}]
  %s6 = inlined_call_operand.vmem [shape: f32[32,128], index: 6, kind: output, shape index: {}]
  %s7 = sld [smem:[#allocation0]]
  $region34: #{conv_unit_forward.1} parent=0
    _
  %s9 = ssub.s32 1, %s7
  %s10 = scalar_select 0, %s9, %s7
  // Predicated region
  $region2: #{conv_unit_forward.1} parent=0 // pred_check
    _
  $region3: #{conv_unit_forward.1} parent=0 // pred_check_branch
    %12 = sbr.rel (0) target = $region5
  $region4: #{conv_unit_forward.1} parent=0 // pred_region
    _
  $region5: #{conv_unit_forward.1} parent=0 // pred_fallthru
    _
  // Predicated region
  $region6: #{conv_unit_forward.1} parent=0 // pred_check
    _
  $region7: #{conv_unit_forward.1} parent=0 // pred_check_branch
    %14 = sbr.rel (0) target = $region9
  $region8: #{conv_unit_forward.1} parent=0 // pred_region
    _
  $region9: #{conv_unit_forward.1} parent=0 // pred_fallthru
    _
  // Predicated region
  $region10: #{conv_unit_forward.1} parent=0 // pred_check
    _
  $region11: #{conv_unit_forward.1} parent=0 // pred_check_branch
    %16 = sbr.rel (0) target = $region13
  $region12: #{conv_unit_forward.1} parent=0 // pred_region
    _
  $region13: #{conv_unit_forward.1} parent=0 // pred_fallthru
    _
  // Predicated region
  $region14: #{conv_unit_forward.1} parent=0 // pred_check
    _
  $region15: #{conv_unit_forward.1} parent=0 // pred_check_branch
    %18 = sbr.rel (0) target = $region17
  $region16: #{conv_unit_forward.1} parent=0 // pred_region
    _
  $region17: #{conv_unit_forward.1} parent=0 // pred_fallthru
    _
  // Predicated region
  $region18: #{conv_unit_forward.1} parent=0 // pred_check
    _
  $region19: #{conv_unit_forward.1} parent=0 // pred_check_branch
    %20 = sbr.rel (0) target = $region21
  $region20: #{conv_unit_forward.1} parent=0 // pred_region
    _
  $region21: #{conv_unit_forward.1} parent=0 // pred_fallthru
    _
  // Predicated region
  $region22: #{conv_unit_forward.1} parent=0 // pred_check
    _
  $region23: #{conv_unit_forward.1} parent=0 // pred_check_branch
    %22 = sbr.rel (0) target = $region25
  $region24: #{conv_unit_forward.1} parent=0 // pred_region
    _
  $region25: #{conv_unit_forward.1} parent=0 // pred_fallthru
    _
  %v23 = vld [vmem:[%s0] sm:$0xff]
  %v24 = vld [vmem:[%s0 + $0x8] sm:$0xff]
  %v25 = vld [vmem:[%s0 + $0x10] sm:$0xff]
  %v26 = vld [vmem:[%s0 + $0x18] sm:$0xff]
  %v27 = vld [vmem:[%s1] sm:$0xff]
  %v28 = vld [vmem:[%s1 + $0x8] sm:$0xff]
  %v29 = vld [vmem:[%s1 + $0x10] sm:$0xff]
  %v30 = vld [vmem:[%s1 + $0x18] sm:$0xff]
  %v31 = vld [vmem:[%s1 + $0x20] sm:$0xff]
  %v32 = vld [vmem:[%s1 + $0x28] sm:$0xff]
  %v33 = vld [vmem:[%s1 + $0x30] sm:$0xff]
  %v34 = vld [vmem:[%s1 + $0x38] sm:$0xff]
  %v35 = vld [vmem:[%s0 + $0x1] sm:$0xff]
  %v36 = vld [vmem:[%s0 + $0x9] sm:$0xff]
  %v37 = vld [vmem:[%s0 + $0x11] sm:$0xff]
  %v38 = vld [vmem:[%s0 + $0x19] sm:$0xff]
  %s39 = scalar_lea.vmem %s1, 64
  %v40 = vld [vmem:[%s39] sm:$0xff]
  %v41 = vld [vmem:[%s39 + $0x8] sm:$0xff]
  %v42 = vld [vmem:[%s39 + $0x10] sm:$0xff]
  %v43 = vld [vmem:[%s39 + $0x18] sm:$0xff]
  %v44 = vld [vmem:[%s39 + $0x20] sm:$0xff]
  %v45 = vld [vmem:[%s39 + $0x28] sm:$0xff]
  %v46 = vld [vmem:[%s39 + $0x30] sm:$0xff]
  %v47 = vld [vmem:[%s39 + $0x38] sm:$0xff]
  %vm48 = vcmask 523264
  %v50 = vsel %vm48, %v35, 0
  %v53 = vsel %vm48, %v36, 0
  %v56 = vsel %vm48, %v37, 0
  %v59 = vsel %vm48, %v38, 0
  %61 = vmatprep.subr.mxu0 0.0
  %62 = vmatpush1.msra.mxu0 0.0
  %63 = vmatprep.subr.mxu0 0.0
  %64 = vmatpush1.msra.mxu0 0.0
  %65 = vmatprep.subr.mxu0 0.0
  %66 = vmatpush1.msra.mxu0 0.0
  %67 = vmatprep.subr.mxu0 0.0
  %68 = vmatpush1.msra.mxu0 0.0
  %69 = vmatprep.subr.mxu0 0.0
  %70 = vmatpush1.msra.mxu0 0.0
  %71 = vmatprep.subr.mxu0 0.0
  %72 = vmatpush1.msra.mxu0 0.0
  %73 = vmatprep.subr.mxu0 0.0
  %74 = vmatpush1.msra.mxu0 0.0
  %75 = vmatprep.subr.mxu0 0.0
  %76 = vmatpush1.msra.mxu0 0.0
  %77 = vmatprep.subr.mxu0 0.0
  %78 = vmatpush1.msra.mxu0 %v47
  %79 = vmatprep.subr.mxu0 0.0
  %80 = vmatpush1.msra.mxu0 %v46
  %81 = vmatprep.subr.mxu0 0.0
  %82 = vmatpush1.msra.mxu0 %v45
  %83 = vmatprep.subr.mxu0 0.0
  %84 = vmatpush1.msra.mxu0 %v44
  %85 = vmatprep.subr.mxu0 0.0
  %86 = vmatpush1.msra.mxu0 %v43
  %87 = vmatprep.subr.mxu0 0.0
  %88 = vmatpush1.msra.mxu0 %v42
  %89 = vmatprep.subr.mxu0 0.0
  %90 = vmatpush1.msra.mxu0 %v41
  %91 = vmatprep.subr.mxu0 0.0
  %92 = vmatpush1.msra.mxu0 %v40
  %93 = vmatprep.subr.mxu0 0.0
  %94 = vmatpush2.msra.mxu0 0.0
  %95 = vmatprep.subr.mxu0 0.0
  %96 = vmatpush2.msra.mxu0 0.0
  %97 = vmatprep.subr.mxu0 0.0
  %98 = vmatpush2.msra.mxu0 0.0
  %99 = vmatprep.subr.mxu0 0.0
  %100 = vmatpush2.msra.mxu0 0.0
  %101 = vmatprep.subr.mxu0 0.0
  %102 = vmatpush2.msra.mxu0 0.0
  %103 = vmatprep.subr.mxu0 0.0
  %104 = vmatpush2.msra.mxu0 0.0
  %105 = vmatprep.subr.mxu0 0.0
  %106 = vmatpush2.msra.mxu0 0.0
  %107 = vmatprep.subr.mxu0 0.0
  %108 = vmatpush2.msra.mxu0 0.0
  %109 = vmatprep.subr.mxu0 0.0
  %110 = vmatpush2.msra.mxu0 0.0
  %111 = vmatprep.subr.mxu0 0.0
  %112 = vmatpush2.msra.mxu0 0.0
  %113 = vmatprep.subr.mxu0 0.0
  %114 = vmatpush2.msra.mxu0 0.0
  %115 = vmatprep.subr.mxu0 0.0
  %116 = vmatpush2.msra.mxu0 0.0
  %117 = vmatprep.subr.mxu0 0.0
  %118 = vmatpush2.msra.mxu0 0.0
  %119 = vmatprep.subr.mxu0 0.0
  %120 = vmatpush2.msra.mxu0 0.0
  %121 = vmatprep.subr.mxu0 0.0
  %122 = vmatpush2.msra.mxu0 0.0
  %123 = vmatprep.subr.mxu0 0.0
  %124 = vmatpush2.msra.mxu0 0.0
  %125 = vmatprep.mubr.f32.mxu0 0.0
  %126 = vmatmul.mubr.f32.gmra.mxu0 %v50
  %v127 = vpop.f32.mrf.mxu0
  %v128 = vadd.f32 0.0, %v127
  %v129 = vpop.f32.mrf.mxu0
  %130 = vmatprep.mubr.f32.mxu0 0.0
  %131 = vmatmul.mubr.f32.gmra.mxu0 %v53
  %v132 = vpop.f32.mrf.mxu0
  %v133 = vadd.f32 0.0, %v132
  %v134 = vpop.f32.mrf.mxu0
  %135 = vmatprep.mubr.f32.mxu0 0.0
  %136 = vmatmul.mubr.f32.gmra.mxu0 %v56
  %v137 = vpop.f32.mrf.mxu0
  %v138 = vadd.f32 0.0, %v137
  %v139 = vpop.f32.mrf.mxu0
  %140 = vmatprep.mubr.f32.mxu0 0.0
  %141 = vmatmul.mubr.f32.gmra.mxu0 %v59
  %v142 = vpop.f32.mrf.mxu0
  %v143 = vadd.f32 0.0, %v142
  %v144 = vpop.f32.mrf.mxu0
  %145 = vdwg.mxu0
  %v147 = vsel %vm48, %v23, 0
  %v150 = vsel %vm48, %v24, 0
  %v153 = vsel %vm48, %v25, 0
  %v156 = vsel %vm48, %v26, 0
  %158 = vmatprep.subr.mxu0 0.0
  %159 = vmatpush1.msra.mxu0 0.0
  %160 = vmatprep.subr.mxu0 0.0
  %161 = vmatpush1.msra.mxu0 0.0
  %162 = vmatprep.subr.mxu0 0.0
  %163 = vmatpush1.msra.mxu0 0.0
  %164 = vmatprep.subr.mxu0 0.0
  %165 = vmatpush1.msra.mxu0 0.0
  %166 = vmatprep.subr.mxu0 0.0
  %167 = vmatpush1.msra.mxu0 0.0
  %168 = vmatprep.subr.mxu0 0.0
  %169 = vmatpush1.msra.mxu0 0.0
  %170 = vmatprep.subr.mxu0 0.0
  %171 = vmatpush1.msra.mxu0 0.0
  %172 = vmatprep.subr.mxu0 0.0
  %173 = vmatpush1.msra.mxu0 0.0
  %174 = vmatprep.subr.mxu0 0.0
  %175 = vmatpush1.msra.mxu0 %v34
  %176 = vmatprep.subr.mxu0 0.0
  %177 = vmatpush1.msra.mxu0 %v33
  %178 = vmatprep.subr.mxu0 0.0
  %179 = vmatpush1.msra.mxu0 %v32
  %180 = vmatprep.subr.mxu0 0.0
  %181 = vmatpush1.msra.mxu0 %v31
  %182 = vmatprep.subr.mxu0 0.0
  %183 = vmatpush1.msra.mxu0 %v30
  %184 = vmatprep.subr.mxu0 0.0
  %185 = vmatpush1.msra.mxu0 %v29
  %186 = vmatprep.subr.mxu0 0.0
  %187 = vmatpush1.msra.mxu0 %v28
  %188 = vmatprep.subr.mxu0 0.0
  %189 = vmatpush1.msra.mxu0 %v27
  %190 = vmatprep.subr.mxu0 0.0
  %191 = vmatpush2.msra.mxu0 0.0
  %192 = vmatprep.subr.mxu0 0.0
  %193 = vmatpush2.msra.mxu0 0.0
  %194 = vmatprep.subr.mxu0 0.0
  %195 = vmatpush2.msra.mxu0 0.0
  %196 = vmatprep.subr.mxu0 0.0
  %197 = vmatpush2.msra.mxu0 0.0
  %198 = vmatprep.subr.mxu0 0.0
  %199 = vmatpush2.msra.mxu0 0.0
  %200 = vmatprep.subr.mxu0 0.0
  %201 = vmatpush2.msra.mxu0 0.0
  %202 = vmatprep.subr.mxu0 0.0
  %203 = vmatpush2.msra.mxu0 0.0
  %204 = vmatprep.subr.mxu0 0.0
  %205 = vmatpush2.msra.mxu0 0.0
  %206 = vmatprep.subr.mxu0 0.0
  %207 = vmatpush2.msra.mxu0 0.0
  %208 = vmatprep.subr.mxu0 0.0
  %209 = vmatpush2.msra.mxu0 0.0
  %210 = vmatprep.subr.mxu0 0.0
  %211 = vmatpush2.msra.mxu0 0.0
  %212 = vmatprep.subr.mxu0 0.0
  %213 = vmatpush2.msra.mxu0 0.0
  %214 = vmatprep.subr.mxu0 0.0
  %215 = vmatpush2.msra.mxu0 0.0
  %216 = vmatprep.subr.mxu0 0.0
  %217 = vmatpush2.msra.mxu0 0.0
  %218 = vmatprep.subr.mxu0 0.0
  %219 = vmatpush2.msra.mxu0 0.0
  %220 = vmatprep.subr.mxu0 0.0
  %221 = vmatpush2.msra.mxu0 0.0
  %222 = vmatprep.mubr.f32.mxu0 0.0
  %223 = vmatmul.mubr.f32.gmra.mxu0 %v147
  %v224 = vpop.f32.mrf.mxu0
  %v225 = vadd.f32 %v128, %v224
  %v226 = vpop.f32.mrf.mxu0
  %227 = vmatprep.mubr.f32.mxu0 0.0
  %228 = vmatmul.mubr.f32.gmra.mxu0 %v150
  %v229 = vpop.f32.mrf.mxu0
  %v230 = vadd.f32 %v133, %v229
  %v231 = vpop.f32.mrf.mxu0
  %232 = vmatprep.mubr.f32.mxu0 0.0
  %233 = vmatmul.mubr.f32.gmra.mxu0 %v153
  %v234 = vpop.f32.mrf.mxu0
  %v235 = vadd.f32 %v138, %v234
  %v236 = vpop.f32.mrf.mxu0
  %237 = vmatprep.mubr.f32.mxu0 0.0
  %238 = vmatmul.mubr.f32.gmra.mxu0 %v156
  %v239 = vpop.f32.mrf.mxu0
  %v240 = vadd.f32 %v143, %v239
  %v241 = vpop.f32.mrf.mxu0
  %242 = vdwg.mxu0
  %v243 = vld [vmem:[%s0 + $0x2] sm:$0xff]
  %v244 = vld [vmem:[%s0 + $0xa] sm:$0xff]
  %v245 = vld [vmem:[%s0 + $0x12] sm:$0xff]
  %v246 = vld [vmem:[%s0 + $0x1a] sm:$0xff]
  %s247 = scalar_lea.vmem %s1, 128
  %v248 = vld [vmem:[%s247] sm:$0xff]
  %v249 = vld [vmem:[%s247 + $0x8] sm:$0xff]
  %v250 = vld [vmem:[%s247 + $0x10] sm:$0xff]
  %v251 = vld [vmem:[%s247 + $0x18] sm:$0xff]
  %v252 = vld [vmem:[%s247 + $0x20] sm:$0xff]
  %v253 = vld [vmem:[%s247 + $0x28] sm:$0xff]
  %v254 = vld [vmem:[%s247 + $0x30] sm:$0xff]
  %v255 = vld [vmem:[%s247 + $0x38] sm:$0xff]
  %v257 = vsel %vm48, %v243, 0
  %v260 = vsel %vm48, %v244, 0
  %v263 = vsel %vm48, %v245, 0
  %v266 = vsel %vm48, %v246, 0
  %268 = vmatprep.subr.mxu0 0.0
  %269 = vmatpush1.msra.mxu0 0.0
  %270 = vmatprep.subr.mxu0 0.0
  %271 = vmatpush1.msra.mxu0 0.0
  %272 = vmatprep.subr.mxu0 0.0
  %273 = vmatpush1.msra.mxu0 0.0
  %274 = vmatprep.subr.mxu0 0.0
  %275 = vmatpush1.msra.mxu0 0.0
  %276 = vmatprep.subr.mxu0 0.0
  %277 = vmatpush1.msra.mxu0 0.0
  %278 = vmatprep.subr.mxu0 0.0
  %279 = vmatpush1.msra.mxu0 0.0
  %280 = vmatprep.subr.mxu0 0.0
  %281 = vmatpush1.msra.mxu0 0.0
  %282 = vmatprep.subr.mxu0 0.0
  %283 = vmatpush1.msra.mxu0 0.0
  %284 = vmatprep.subr.mxu0 0.0
  %285 = vmatpush1.msra.mxu0 %v255
  %286 = vmatprep.subr.mxu0 0.0
  %287 = vmatpush1.msra.mxu0 %v254
  %288 = vmatprep.subr.mxu0 0.0
  %289 = vmatpush1.msra.mxu0 %v253
  %290 = vmatprep.subr.mxu0 0.0
  %291 = vmatpush1.msra.mxu0 %v252
  %292 = vmatprep.subr.mxu0 0.0
  %293 = vmatpush1.msra.mxu0 %v251
  %294 = vmatprep.subr.mxu0 0.0
  %295 = vmatpush1.msra.mxu0 %v250
  %296 = vmatprep.subr.mxu0 0.0
  %297 = vmatpush1.msra.mxu0 %v249
  %298 = vmatprep.subr.mxu0 0.0
  %299 = vmatpush1.msra.mxu0 %v248
  %300 = vmatprep.subr.mxu0 0.0
  %301 = vmatpush2.msra.mxu0 0.0
  %302 = vmatprep.subr.mxu0 0.0
  %303 = vmatpush2.msra.mxu0 0.0
  %304 = vmatprep.subr.mxu0 0.0
  %305 = vmatpush2.msra.mxu0 0.0
  %306 = vmatprep.subr.mxu0 0.0
  %307 = vmatpush2.msra.mxu0 0.0
  %308 = vmatprep.subr.mxu0 0.0
  %309 = vmatpush2.msra.mxu0 0.0
  %310 = vmatprep.subr.mxu0 0.0
  %311 = vmatpush2.msra.mxu0 0.0
  %312 = vmatprep.subr.mxu0 0.0
  %313 = vmatpush2.msra.mxu0 0.0
  %314 = vmatprep.subr.mxu0 0.0
  %315 = vmatpush2.msra.mxu0 0.0
  %316 = vmatprep.subr.mxu0 0.0
  %317 = vmatpush2.msra.mxu0 0.0
  %318 = vmatprep.subr.mxu0 0.0
  %319 = vmatpush2.msra.mxu0 0.0
  %320 = vmatprep.subr.mxu0 0.0
  %321 = vmatpush2.msra.mxu0 0.0
  %322 = vmatprep.subr.mxu0 0.0
  %323 = vmatpush2.msra.mxu0 0.0
  %324 = vmatprep.subr.mxu0 0.0
  %325 = vmatpush2.msra.mxu0 0.0
  %326 = vmatprep.subr.mxu0 0.0
  %327 = vmatpush2.msra.mxu0 0.0
  %328 = vmatprep.subr.mxu0 0.0
  %329 = vmatpush2.msra.mxu0 0.0
  %330 = vmatprep.subr.mxu0 0.0
  %331 = vmatpush2.msra.mxu0 0.0
  %332 = vmatprep.mubr.f32.mxu0 0.0
  %333 = vmatmul.mubr.f32.gmra.mxu0 %v257
  %v334 = vpop.f32.mrf.mxu0
  %v335 = vadd.f32 0.0, %v334
  %v336 = vpop.f32.mrf.mxu0
  %337 = vmatprep.mubr.f32.mxu0 0.0
  %338 = vmatmul.mubr.f32.gmra.mxu0 %v260
  %v339 = vpop.f32.mrf.mxu0
  %v340 = vadd.f32 0.0, %v339
  %v341 = vpop.f32.mrf.mxu0
  %342 = vmatprep.mubr.f32.mxu0 0.0
  %343 = vmatmul.mubr.f32.gmra.mxu0 %v263
  %v344 = vpop.f32.mrf.mxu0
  %v345 = vadd.f32 0.0, %v344
  %v346 = vpop.f32.mrf.mxu0
  %347 = vmatprep.mubr.f32.mxu0 0.0
  %348 = vmatmul.mubr.f32.gmra.mxu0 %v266
  %v349 = vpop.f32.mrf.mxu0
  %v350 = vadd.f32 0.0, %v349
  %v351 = vpop.f32.mrf.mxu0
  %352 = vdwg.mxu0
  %v353 = vadd.f32 %v225, %v335
  %v354 = vadd.f32 %v230, %v340
  %v355 = vadd.f32 %v235, %v345
  %v356 = vadd.f32 %v240, %v350
  %v357 = vld [vmem:[%s2] sm:$0x1]
  %v359 = vlaneseq
  %v360 = vshrl.u32 %v359, 7
  %v361 = vsub.s32 0, %v360
  %v362 = vrot.slane %v357, %v361
  %v364 = vadd.f32 %v353, %v362
  %v365 = vadd.f32 %v354, %v362
  %v366 = vadd.f32 %v355, %v362
  %v367 = vadd.f32 %v356, %v362
  %vm368 = vcmp.gt.f32.partialorder %v364, 0.0
  %vm369 = vcmp.gt.f32.partialorder %v365, 0.0
  %vm370 = vcmp.gt.f32.partialorder %v366, 0.0
  %vm371 = vcmp.gt.f32.partialorder %v367, 0.0
  %v372 = vmul.f32 %v364, 0.1
  %v373 = vmul.f32 %v365, 0.1
  %v374 = vmul.f32 %v366, 0.1
  %v375 = vmul.f32 %v367, 0.1
  %v376 = vsel %vm368, %v364, %v372
  %v377 = vsel %vm369, %v365, %v373
  %v378 = vsel %vm370, %v366, %v374
  %v379 = vsel %vm371, %v367, %v375
  %v380 = vlaneseq
  %v381 = vshrl.u32 %v380, 7
  %v382 = vadd.s32 %v381, 8
  %v383 = vadd.s32 %v381, 16
  %v384 = vadd.s32 %v381, 24
  %v385 = vlaneseq
  %v386 = vand.u32 %v385, 127
  %vm387 = vcmp.lt.s32.totalorder %v381, 0
  %v388 = vsub.s32 0, %v381
  %v389 = vsel %vm387, %v388, %v381
  %v390 = vshrl.u32 %v389, 4
  %v391 = vand.u32 %v389, 15
  %v392 = vsub.s32 0, %v391
  %v393 = vsel %vm387, %v392, %v391
  %vm394 = vcmp.lt.s32.totalorder %v382, 0
  %v395 = vsub.s32 0, %v382
  %v396 = vsel %vm394, %v395, %v382
  %v397 = vshrl.u32 %v396, 4
  %v398 = vand.u32 %v396, 15
  %v399 = vsub.s32 0, %v398
  %v400 = vsel %vm394, %v399, %v398
  %vm401 = vcmp.lt.s32.totalorder %v383, 0
  %v402 = vsub.s32 0, %v383
  %v403 = vsel %vm401, %v402, %v383
  %v404 = vshrl.u32 %v403, 4
  %v405 = vand.u32 %v403, 15
  %v406 = vsub.s32 0, %v405
  %v407 = vsel %vm401, %v406, %v405
  %vm408 = vcmp.lt.s32.totalorder %v384, 0
  %v409 = vsub.s32 0, %v384
  %v410 = vsel %vm408, %v409, %v384
  %v411 = vshrl.u32 %v410, 4
  %v412 = vand.u32 %v410, 15
  %v413 = vsub.s32 0, %v412
  %v414 = vsel %vm408, %v413, %v412
  %vm415 = vcmp.ne.s32.totalorder %v393, 0
  %vm416 = vcmp.ne.s32.totalorder %v400, 0
  %vm417 = vcmp.ne.s32.totalorder %v407, 0
  %vm418 = vcmp.ne.s32.totalorder %v414, 0
  %vm419 = vcmp.lt.s32.totalorder %v393, 0
  %vm420 = vcmp.lt.s32.totalorder %v400, 0
  %vm421 = vcmp.lt.s32.totalorder %v407, 0
  %vm422 = vcmp.lt.s32.totalorder %v414, 0
  %vm423 = vmand %vm419, %vm415
  %vm424 = vmand %vm420, %vm416
  %vm425 = vmand %vm421, %vm417
  %vm426 = vmand %vm422, %vm418
  %v427 = vadd.s32 %v393, 16
  %v428 = vadd.s32 %v400, 16
  %v429 = vadd.s32 %v407, 16
  %v430 = vadd.s32 %v414, 16
  %v431 = vsel %vm423, %v427, %v393
  %v432 = vsel %vm424, %v428, %v400
  %v433 = vsel %vm425, %v429, %v407
  %v434 = vsel %vm426, %v430, %v414
  %vm435 = vcmp.lt.s32.totalorder %v431, 14
  %vm436 = vcmp.lt.s32.totalorder %v432, 14
  %vm437 = vcmp.lt.s32.totalorder %v433, 14
  %vm438 = vcmp.lt.s32.totalorder %v434, 14
  %vm439 = vcmp.lt.s32.totalorder %v386, 112
  %vm440 = vmand %vm435, %vm439
  %vm441 = vmand %vm436, %vm439
  %vm442 = vmand %vm437, %vm439
  %vm443 = vmand %vm438, %vm439
  %v444 = vsel %vm440, %v376, 0.0
  %v445 = vsel %vm441, %v377, 0.0
  %v446 = vsel %vm442, %v378, 0.0
  %v447 = vsel %vm443, %v379, 0.0
  %v448 = vadd.f32 %v444, %v445
  %v449 = vadd.f32 %v448, %v446
  %v450 = vadd.f32 %v449, %v447
  %v451 = vrot.slane %v450, 4
  %v452 = vadd.f32 %v450, %v451
  %v453 = vrot.slane %v452, 2
  %v454 = vadd.f32 %v452, %v453
  %v455 = vrot.slane %v454, 1
  %v456 = vadd.f32 %v454, %v455
  %v457 = vmul.f32 %v444, %v444
  %v458 = vmul.f32 %v445, %v445
  %v459 = vmul.f32 %v446, %v446
  %v460 = vmul.f32 %v447, %v447
  %v461 = vadd.f32 %v457, %v458
  %v462 = vadd.f32 %v461, %v459
  %v463 = vadd.f32 %v462, %v460
  %v464 = vrot.slane %v463, 4
  %v465 = vadd.f32 %v463, %v464
  %v466 = vrot.slane %v465, 2
  %v467 = vadd.f32 %v465, %v466
  %v468 = vrot.slane %v467, 1
  %v469 = vadd.f32 %v467, %v468
  %v470 = vld [vmem:[%s5] sm:$0xff]
  %v471 = vld [vmem:[%s5 + $0x8] sm:$0xff]
  %v472 = vld [vmem:[%s5 + $0x10] sm:$0xff]
  %v473 = vld [vmem:[%s5 + $0x18] sm:$0xff]
  %v474 = vld [vmem:[%s5 + $0x20] sm:$0xff]
  %v475 = vld [vmem:[%s5 + $0x28] sm:$0xff]
  %v476 = vld [vmem:[%s5 + $0x30] sm:$0xff]
  %v477 = vld [vmem:[%s5 + $0x38] sm:$0xff]
  %v478 = vld [vmem:[%s5 + $0x40] sm:$0xff]
  %v479 = vld [vmem:[%s5 + $0x48] sm:$0xff]
  %v480 = vld [vmem:[%s5 + $0x50] sm:$0xff]
  %v481 = vld [vmem:[%s5 + $0x58] sm:$0xff]
  %v482 = vld [vmem:[%s5 + $0x60] sm:$0xff]
  %v483 = vld [vmem:[%s5 + $0x68] sm:$0xff]
  %v484 = vld [vmem:[%s5 + $0x70] sm:$0xff]
  %v485 = vld [vmem:[%s5 + $0x78] sm:$0xff]
  %486 = vmatprep.subr.mxu0 0.0
  %487 = vmatpush1.msra.mxu0 %v485
  %488 = vmatprep.subr.mxu0 0.0
  %489 = vmatpush1.msra.mxu0 %v484
  %490 = vmatprep.subr.mxu0 0.0
  %491 = vmatpush1.msra.mxu0 %v483
  %492 = vmatprep.subr.mxu0 0.0
  %493 = vmatpush1.msra.mxu0 %v482
  %494 = vmatprep.subr.mxu0 0.0
  %495 = vmatpush1.msra.mxu0 %v481
  %496 = vmatprep.subr.mxu0 0.0
  %497 = vmatpush1.msra.mxu0 %v480
  %498 = vmatprep.subr.mxu0 0.0
  %499 = vmatpush1.msra.mxu0 %v479
  %500 = vmatprep.subr.mxu0 0.0
  %501 = vmatpush1.msra.mxu0 %v478
  %502 = vmatprep.subr.mxu0 0.0
  %503 = vmatpush1.msra.mxu0 %v477
  %504 = vmatprep.subr.mxu0 0.0
  %505 = vmatpush1.msra.mxu0 %v476
  %506 = vmatprep.subr.mxu0 0.0
  %507 = vmatpush1.msra.mxu0 %v475
  %508 = vmatprep.subr.mxu0 0.0
  %509 = vmatpush1.msra.mxu0 %v474
  %510 = vmatprep.subr.mxu0 0.0
  %511 = vmatpush1.msra.mxu0 %v473
  %512 = vmatprep.subr.mxu0 0.0
  %513 = vmatpush1.msra.mxu0 %v472
  %514 = vmatprep.subr.mxu0 0.0
  %515 = vmatpush1.msra.mxu0 %v471
  %516 = vmatprep.subr.mxu0 0.0
  %517 = vmatpush1.msra.mxu0 %v470
  %518 = vmatprep.subr.mxu0 0.0
  %519 = vmatpush2.msra.mxu0 0.0
  %520 = vmatprep.subr.mxu0 0.0
  %521 = vmatpush2.msra.mxu0 0.0
  %522 = vmatprep.subr.mxu0 0.0
  %523 = vmatpush2.msra.mxu0 0.0
  %524 = vmatprep.subr.mxu0 0.0
  %525 = vmatpush2.msra.mxu0 0.0
  %526 = vmatprep.subr.mxu0 0.0
  %527 = vmatpush2.msra.mxu0 0.0
  %528 = vmatprep.subr.mxu0 0.0
  %529 = vmatpush2.msra.mxu0 0.0
  %530 = vmatprep.subr.mxu0 0.0
  %531 = vmatpush2.msra.mxu0 0.0
  %532 = vmatprep.subr.mxu0 0.0
  %533 = vmatpush2.msra.mxu0 0.0
  %534 = vmatprep.subr.mxu0 0.0
  %535 = vmatpush2.msra.mxu0 0.0
  %536 = vmatprep.subr.mxu0 0.0
  %537 = vmatpush2.msra.mxu0 0.0
  %538 = vmatprep.subr.mxu0 0.0
  %539 = vmatpush2.msra.mxu0 0.0
  %540 = vmatprep.subr.mxu0 0.0
  %541 = vmatpush2.msra.mxu0 0.0
  %542 = vmatprep.subr.mxu0 0.0
  %543 = vmatpush2.msra.mxu0 0.0
  %544 = vmatprep.subr.mxu0 0.0
  %545 = vmatpush2.msra.mxu0 0.0
  %546 = vmatprep.subr.mxu0 0.0
  %547 = vmatpush2.msra.mxu0 0.0
  %548 = vmatprep.subr.mxu0 0.0
  %549 = vmatpush2.msra.mxu0 0.0
  %550 = vmatprep.mubr.f32.mxu0 0.0
  %551 = vmatmul.mubr.f32.gmra.mxu0 %v456
  %v552 = vpop.f32.mrf.mxu0
  %v553 = vadd.f32 0.0, %v552
  %v554 = vpop.f32.mrf.mxu0
  %555 = vdwg.mxu0
  %v556 = vmul.f32 %v553, 0.0025510204
  %557 = vmatprep.subr.mxu0 0.0
  %558 = vmatpush1.msra.mxu0 %v485
  %559 = vmatprep.subr.mxu0 0.0
  %560 = vmatpush1.msra.mxu0 %v484
  %561 = vmatprep.subr.mxu0 0.0
  %562 = vmatpush1.msra.mxu0 %v483
  %563 = vmatprep.subr.mxu0 0.0
  %564 = vmatpush1.msra.mxu0 %v482
  %565 = vmatprep.subr.mxu0 0.0
  %566 = vmatpush1.msra.mxu0 %v481
  %567 = vmatprep.subr.mxu0 0.0
  %568 = vmatpush1.msra.mxu0 %v480
  %569 = vmatprep.subr.mxu0 0.0
  %570 = vmatpush1.msra.mxu0 %v479
  %571 = vmatprep.subr.mxu0 0.0
  %572 = vmatpush1.msra.mxu0 %v478
  %573 = vmatprep.subr.mxu0 0.0
  %574 = vmatpush1.msra.mxu0 %v477
  %575 = vmatprep.subr.mxu0 0.0
  %576 = vmatpush1.msra.mxu0 %v476
  %577 = vmatprep.subr.mxu0 0.0
  %578 = vmatpush1.msra.mxu0 %v475
  %579 = vmatprep.subr.mxu0 0.0
  %580 = vmatpush1.msra.mxu0 %v474
  %581 = vmatprep.subr.mxu0 0.0
  %582 = vmatpush1.msra.mxu0 %v473
  %583 = vmatprep.subr.mxu0 0.0
  %584 = vmatpush1.msra.mxu0 %v472
  %585 = vmatprep.subr.mxu0 0.0
  %586 = vmatpush1.msra.mxu0 %v471
  %587 = vmatprep.subr.mxu0 0.0
  %588 = vmatpush1.msra.mxu0 %v470
  %589 = vmatprep.subr.mxu0 0.0
  %590 = vmatpush2.msra.mxu0 0.0
  %591 = vmatprep.subr.mxu0 0.0
  %592 = vmatpush2.msra.mxu0 0.0
  %593 = vmatprep.subr.mxu0 0.0
  %594 = vmatpush2.msra.mxu0 0.0
  %595 = vmatprep.subr.mxu0 0.0
  %596 = vmatpush2.msra.mxu0 0.0
  %597 = vmatprep.subr.mxu0 0.0
  %598 = vmatpush2.msra.mxu0 0.0
  %599 = vmatprep.subr.mxu0 0.0
  %600 = vmatpush2.msra.mxu0 0.0
  %601 = vmatprep.subr.mxu0 0.0
  %602 = vmatpush2.msra.mxu0 0.0
  %603 = vmatprep.subr.mxu0 0.0
  %604 = vmatpush2.msra.mxu0 0.0
  %605 = vmatprep.subr.mxu0 0.0
  %606 = vmatpush2.msra.mxu0 0.0
  %607 = vmatprep.subr.mxu0 0.0
  %608 = vmatpush2.msra.mxu0 0.0
  %609 = vmatprep.subr.mxu0 0.0
  %610 = vmatpush2.msra.mxu0 0.0
  %611 = vmatprep.subr.mxu0 0.0
  %612 = vmatpush2.msra.mxu0 0.0
  %613 = vmatprep.subr.mxu0 0.0
  %614 = vmatpush2.msra.mxu0 0.0
  %615 = vmatprep.subr.mxu0 0.0
  %616 = vmatpush2.msra.mxu0 0.0
  %617 = vmatprep.subr.mxu0 0.0
  %618 = vmatpush2.msra.mxu0 0.0
  %619 = vmatprep.subr.mxu0 0.0
  %620 = vmatpush2.msra.mxu0 0.0
  %621 = vmatprep.mubr.f32.mxu0 0.0
  %622 = vmatmul.mubr.f32.gmra.mxu0 %v469
  %v623 = vpop.f32.mrf.mxu0
  %v624 = vadd.f32 0.0, %v623
  %v625 = vpop.f32.mrf.mxu0
  %626 = vdwg.mxu0
  %v627 = vmul.f32 %v624, 0.0025510204
  %v628 = vmul.f32 %v556, %v556
  %v629 = vsub.f32 %v627, %v628
  %v630 = vld [vmem:[%s3] sm:$0x1]
  %v631 = vadd.f32 %v629, 1e-05
  %v632 = vrsqrt.pop %v631
  %v633 = vmul.f32 %v630, %v632
  %v634 = vld [vmem:[%s4] sm:$0x1]
  %v635 = vmul.f32 %v556, %v633
  %v636 = vsub.f32 %v634, %v635
  %v638 = vlaneseq
  %v639 = vshrl.u32 %v638, 7
  %v640 = vsub.s32 0, %v639
  %v641 = vrot.slane %v633, %v640
  %v643 = vmul.f32 %v376, %v641
  %v644 = vmul.f32 %v377, %v641
  %v645 = vmul.f32 %v378, %v641
  %v646 = vmul.f32 %v379, %v641
  %v648 = vlaneseq
  %v649 = vshrl.u32 %v648, 7
  %v650 = vsub.s32 0, %v649
  %v651 = vrot.slane %v636, %v650
  %v653 = vadd.f32 %v643, %v651
  %v654 = vadd.f32 %v644, %v651
  %v655 = vadd.f32 %v645, %v651
  %v656 = vadd.f32 %v646, %v651
  %657 = vst [vmem:[%s6] sm:$0xff] %v653
  %658 = vst [vmem:[%s6 + $0x8] sm:$0xff] %v654
  %659 = vst [vmem:[%s6 + $0x10] sm:$0xff] %v655
  %660 = vst [vmem:[%s6 + $0x18] sm:$0xff] %v656
  // Predicated region
  $region26: #{conv_unit_forward.1} parent=0 // pred_check
    _
  $region27: #{conv_unit_forward.1} parent=0 // pred_check_branch
    %662 = sbr.rel (0) target = $region29
  $region28: #{conv_unit_forward.1} parent=0 // pred_region
    _
  $region29: #{conv_unit_forward.1} parent=0 // pred_fallthru
    _
  // Predicated region
  $region30: #{conv_unit_forward.1} parent=0 // pred_check
    _
  $region31: #{conv_unit_forward.1} parent=0 // pred_check_branch
    %664 = sbr.rel (0) target = $region33
  $region32: #{conv_unit_forward.1} parent=0 // pred_region
    _
  $region33: #{conv_unit_forward.1} parent=0 // pred_fallthru
    _

</llo_original>
